<compile_context>
chip_gen: v6e
topology: v6e:2x2x1
jax: 0.10.0
libtpu: 0.0.40
codegen_flags: <defaults>
</compile_context>

<pallas_src>
from functools import partial

import jax
import jax.numpy as jnp
from jax.experimental import pallas as pl
from jax.experimental.pallas import tpu as pltpu

H1 = 16
H2 = 32
LANES = 128


def _policy_kernel(x_ref, p_ref, out_ref, *, obs_pad, r_w2, r_wh, r_b,
                   action_dims):
    A = action_dims

    x = x_ref[...]                              # (TB, obs_pad)

    # Static, tile-aligned views into the packed parameter slab.
    w1 = p_ref[0:obs_pad, :]                    # (obs_pad, 128)  cols :16 live
    w2 = p_ref[r_w2:r_w2 + LANES, :]            # (128, 128)      rows :16, cols :32 live
    wh = p_ref[r_wh:r_wh + LANES, :]            # (128, 128)      rows :32, cols :2A live
    b1 = p_ref[r_b + 0:r_b + 1, :]              # (1, 128)
    b2 = p_ref[r_b + 1:r_b + 2, :]              # (1, 128)
    bh = p_ref[r_b + 2:r_b + 3, :]              # (1, 128)

    # Shared trunk.  Zero-padded weight/bias lanes keep the padded activation
    # lanes exactly zero, so the full-width matmuls are numerically identical
    # to the tight-shaped ones while staying vreg/MXU aligned.
    h1 = jnp.maximum(jnp.dot(x, w1, preferred_element_type=jnp.float32) + b1, 0.0)
    h2 = jnp.maximum(jnp.dot(h1, w2, preferred_element_type=jnp.float32) + b2, 0.0)

    # Fused heads: one matmul + one lane-dense store for both means & stddevs.
    s = jnp.dot(h2, wh, preferred_element_type=jnp.float32) + bh   # (TB, 128)

    # Stable softplus (matches torch.nn.functional.softplus, no overflow).
    sp = jnp.maximum(s, 0.0) + jnp.log1p(jnp.exp(-jnp.abs(s)))

    lane = jax.lax.broadcasted_iota(jnp.int32, s.shape, 1)
    is_std = jnp.logical_and(lane >= A, lane < 2 * A)
    out_ref[...] = jnp.where(is_std, sp, s)


def pack_policy_params(params, obs_space_dims, action_space_dims):
    """Pack all weights/biases into one zero-padded (rows, 128) f32 slab."""
    A = action_space_dims
    assert 2 * A <= LANES, "fused head requires 2*action_dims <= 128"
    assert H1 <= LANES and H2 <= LANES

    obs_pad = max(8, ((obs_space_dims + 7) // 8) * 8)
    r_w1 = 0
    r_w2 = r_w1 + obs_pad
    r_wh = r_w2 + LANES
    r_b = r_wh + LANES
    rows = ((r_b + 3 + 7) // 8) * 8

    slab = jnp.zeros((rows, LANES), jnp.float32)
    slab = slab.at[r_w1:r_w1 + obs_space_dims, :H1].set(params["w1"])
    slab = slab.at[r_w2:r_w2 + H1, :H2].set(params["w2"])
    slab = slab.at[r_wh:r_wh + H2, :A].set(params["wm"])
    slab = slab.at[r_wh:r_wh + H2, A:2 * A].set(params["ws"])
    slab = slab.at[r_b + 0, :H1].set(params["b1"][0])
    slab = slab.at[r_b + 1, :H2].set(params["b2"][0])
    slab = slab.at[r_b + 2, :A].set(params["bm"][0])
    slab = slab.at[r_b + 2, A:2 * A].set(params["bs"][0])

    layout = dict(obs_pad=obs_pad, r_w2=r_w2, r_wh=r_wh, r_b=r_b,
                  rows=rows, action_dims=A)
    return slab, layout


def policy_network_forward(x, slab, layout, *, tile_b=256):
    """x: (B, obs_dims) -> (means (B, A), stddevs (B, A))."""
    B, obs = x.shape
    obs_pad = layout["obs_pad"]
    A = layout["action_dims"]
    rows = layout["rows"]

    # Batch tiling: TB multiple of 8, capped so VMEM stays tiny even with
    # double buffering (fits comfortably in v7x's 64 MiB per core).
    b8 = max(8, -(-B // 8) * 8)
    TB = min(tile_b, b8)
    B_pad = -(-B // TB) * TB

    x_pad = jnp.zeros((B_pad, obs_pad), jnp.float32)
    x_pad = x_pad.at[:B, :obs].set(x.astype(jnp.float32))

    kernel = partial(_policy_kernel,
                     obs_pad=obs_pad,
                     r_w2=layout["r_w2"],
                     r_wh=layout["r_wh"],
                     r_b=layout["r_b"],
                     action_dims=A)

    out = pl.pallas_call(
        kernel,
        out_shape=jax.ShapeDtypeStruct((B_pad, LANES), jnp.float32),
        grid=(B_pad // TB,),
        in_specs=[
            pl.BlockSpec((TB, obs_pad), lambda i: (i, 0)),   # batch tile of x
            pl.BlockSpec((rows, LANES), lambda i: (0, 0)),   # resident params
        ],
        out_specs=pl.BlockSpec((TB, LANES), lambda i: (i, 0)),
        compiler_params=pltpu.CompilerParams(
            dimension_semantics=("parallel",)),              # megacore on v7x
    )(x_pad, slab)

    means = out[:B, :A]
    stddevs = out[:B, A:2 * A]
    return means, stddevs


def init_params(key, obs_space_dims, action_space_dims):
    """Deterministic synthetic parameter init (shapes match the PyTorch module)."""
    ks = jax.random.split(key, 8)

    def lin(kw, kb, fan_in, fan_out):
        bound = 1.0 / jnp.sqrt(fan_in)
        w = jax.random.uniform(kw, (fan_in, fan_out), jnp.float32, -bound, bound)
        b = jax.random.uniform(kb, (1, fan_out), jnp.float32, -bound, bound)
        return w, b

    w1, b1 = lin(ks[0], ks[1], obs_space_dims, H1)
    w2, b2 = lin(ks[2], ks[3], H1, H2)
    wm, bm = lin(ks[4], ks[5], H2, action_space_dims)
    ws, bs = lin(ks[6], ks[7], H2, action_space_dims)
    return dict(w1=w1, b1=b1, w2=w2, b2=b2, wm=wm, bm=bm, ws=ws, bs=bs)


def _reference(x, params):
    h1 = jnp.maximum(x @ params["w1"] + params["b1"], 0.0)
    h2 = jnp.maximum(h1 @ params["w2"] + params["b2"], 0.0)
    means = h2 @ params["wm"] + params["bm"]
    s = h2 @ params["ws"] + params["bs"]
    std = jnp.maximum(s, 0.0) + jnp.log1p(jnp.exp(-jnp.abs(s)))
    return means, std


if __name__ == "__main__":
    obs_space_dims = 6      # e.g. planar quadrotor state
    action_space_dims = 2   # e.g. two rotor thrusts
    batch = 8

    key = jax.random.PRNGKey(0)
    k_param, k_x, k_x2 = jax.random.split(key, 3)
    params = init_params(k_param, obs_space_dims, action_space_dims)
    slab, layout = pack_policy_params(params, obs_space_dims, action_space_dims)

    # Small-batch check.
    x = jax.random.normal(k_x, (batch, obs_space_dims), jnp.float32)
    means, stddevs = policy_network_forward(x, slab, layout)
    jax.block_until_ready((means, stddevs))

    means_ref, std_ref = _reference(x, params)
    assert means.shape == (batch, action_space_dims)
    assert stddevs.shape == (batch, action_space_dims)
    assert jnp.allclose(means, means_ref, atol=1e-5, rtol=1e-5)
    assert jnp.allclose(stddevs, std_ref, atol=1e-5, rtol=1e-5)
    assert bool(jnp.all(stddevs > 0))

    # Larger ragged batch exercises the batch grid + padding path.
    x_big = 10.0 * jax.random.normal(k_x2, (300, obs_space_dims), jnp.float32)
    means_b, std_b = policy_network_forward(x_big, slab, layout)
    jax.block_until_ready((means_b, std_b))
    means_bref, std_bref = _reference(x_big, params)
    assert jnp.allclose(means_b, means_bref, atol=1e-4, rtol=1e-4)
    assert jnp.allclose(std_b, std_bref, atol=1e-4, rtol=1e-4)
    assert bool(jnp.all(jnp.isfinite(std_b)))

    print("KERNEL_OK")
</pallas_src>

<mosaic_0001>
module attributes {stable_mosaic.version = 11 : i64} {
  func.func @_policy_kernel(%arg0: i32, %arg1: memref<8x8xf32, #tpu.memory_space<vmem>>, %arg2: memref<272x128xf32, #tpu.memory_space<vmem>>, %arg3: memref<8x128xf32, #tpu.memory_space<vmem>>) attributes {dimension_semantics = [#tpu.dimension_semantics<parallel>], iteration_bounds = array<i64: 1>, scalar_prefetch = 0 : i64, scratch_operands = 0 : i64, tpu.core_type = #tpu.core_type<tc>, window_params = [{transform_indices = @transform_0, window_bounds = array<i64: 8, 8>}, {pipeline_mode = #tpu.pipeline_mode<synchronous>, transform_indices = @transform_1, window_bounds = array<i64: 272, 128>}, {transform_indices = @transform_2, window_bounds = array<i64: 8, 128>}]} {
    %c0 = arith.constant 0 : index
    %c0_0 = arith.constant 0 : index
    %0 = vector.load %arg1[%c0, %c0_0] : memref<8x8xf32, #tpu.memory_space<vmem>>, vector<8x8xf32>
    %c0_1 = arith.constant 0 : index
    %c0_2 = arith.constant 0 : index
    %1 = vector.load %arg2[%c0_1, %c0_2] : memref<272x128xf32, #tpu.memory_space<vmem>>, vector<8x128xf32>
    %c8 = arith.constant 8 : index
    %c0_3 = arith.constant 0 : index
    %2 = vector.load %arg2[%c8, %c0_3] : memref<272x128xf32, #tpu.memory_space<vmem>>, vector<128x128xf32>
    %c136 = arith.constant 136 : index
    %c0_4 = arith.constant 0 : index
    %3 = vector.load %arg2[%c136, %c0_4] : memref<272x128xf32, #tpu.memory_space<vmem>>, vector<128x128xf32>
    %c264 = arith.constant 264 : index
    %c0_5 = arith.constant 0 : index
    %4 = vector.load %arg2[%c264, %c0_5] : memref<272x128xf32, #tpu.memory_space<vmem>>, vector<1x128xf32>
    %c265 = arith.constant 265 : index
    %c0_6 = arith.constant 0 : index
    %5 = vector.load %arg2[%c265, %c0_6] : memref<272x128xf32, #tpu.memory_space<vmem>>, vector<1x128xf32>
    %c266 = arith.constant 266 : index
    %c0_7 = arith.constant 0 : index
    %6 = vector.load %arg2[%c266, %c0_7] : memref<272x128xf32, #tpu.memory_space<vmem>>, vector<1x128xf32>
    %cst = arith.constant dense<0.000000e+00> : vector<8x128xf32>
    %7 = tpu.matmul %0, %1, %cst {dimension_numbers = #tpu.dot_dimension_numbers<[1], [0], [0], [1], [0, 0, 1, 1], [], []>} : vector<8x8xf32>, vector<8x128xf32>, vector<8x128xf32> -> vector<8x128xf32>
    %8 = vector.broadcast %4 : vector<1x128xf32> to vector<8x128xf32>
    %9 = arith.addf %7, %8 : vector<8x128xf32>
    %cst_8 = arith.constant 0.000000e+00 : f32
    %10 = vector.broadcast %cst_8 : f32 to vector<8x128xf32>
    %11 = arith.maximumf %9, %10 : vector<8x128xf32>
    %cst_9 = arith.constant dense<0.000000e+00> : vector<8x128xf32>
    %12 = tpu.matmul %11, %2, %cst_9 {dimension_numbers = #tpu.dot_dimension_numbers<[1], [0], [0], [1], [0, 0, 1, 1], [], []>} : vector<8x128xf32>, vector<128x128xf32>, vector<8x128xf32> -> vector<8x128xf32>
    %13 = vector.broadcast %5 : vector<1x128xf32> to vector<8x128xf32>
    %14 = arith.addf %12, %13 : vector<8x128xf32>
    %cst_10 = arith.constant 0.000000e+00 : f32
    %15 = vector.broadcast %cst_10 : f32 to vector<8x128xf32>
    %16 = arith.maximumf %14, %15 : vector<8x128xf32>
    %cst_11 = arith.constant dense<0.000000e+00> : vector<8x128xf32>
    %17 = tpu.matmul %16, %3, %cst_11 {dimension_numbers = #tpu.dot_dimension_numbers<[1], [0], [0], [1], [0, 0, 1, 1], [], []>} : vector<8x128xf32>, vector<128x128xf32>, vector<8x128xf32> -> vector<8x128xf32>
    %18 = vector.broadcast %6 : vector<1x128xf32> to vector<8x128xf32>
    %19 = arith.addf %17, %18 : vector<8x128xf32>
    %cst_12 = arith.constant 0.000000e+00 : f32
    %20 = vector.broadcast %cst_12 : f32 to vector<8x128xf32>
    %21 = arith.maximumf %19, %20 : vector<8x128xf32>
    %22 = math.absf %19 : vector<8x128xf32>
    %cst_13 = arith.constant 0.000000e+00 : f32
    %23 = vector.broadcast %cst_13 : f32 to vector<8x128xf32>
    %24 = arith.subf %23, %22 : vector<8x128xf32>
    %25 = math.exp %24 : vector<8x128xf32>
    %26 = math.log1p %25 : vector<8x128xf32>
    %27 = arith.addf %21, %26 : vector<8x128xf32>
    %28 = tpu.iota {dimensions = array<i32: 1>} : vector<8x128xi32>
    %c2_i32 = arith.constant 2 : i32
    %29 = vector.broadcast %c2_i32 : i32 to vector<8x128xi32>
    %30 = arith.cmpi sge, %28, %29 : vector<8x128xi32>
    %c4_i32 = arith.constant 4 : i32
    %31 = vector.broadcast %c4_i32 : i32 to vector<8x128xi32>
    %32 = arith.cmpi slt, %28, %31 : vector<8x128xi32>
    %33 = arith.andi %30, %32 : vector<8x128xi1>
    %34 = arith.select %33, %27, %19 : vector<8x128xi1>, vector<8x128xf32>
    %c0_14 = arith.constant 0 : index
    %c0_15 = arith.constant 0 : index
    %35 = vector.load %arg3[%c0_14, %c0_15] : memref<8x128xf32, #tpu.memory_space<vmem>>, vector<8x128xf32>
    tpu.vector_store %arg3[%c0_14, %c0_15], %34 {strides = array<i32>} : memref<8x128xf32, #tpu.memory_space<vmem>>, vector<8x128xf32>,
    return
  }
  func.func @transform_0(%arg0: i32) -> (i32, i32) {
    %c0_i32 = arith.constant 0 : i32
    %c0_i32_0 = arith.constant 0 : i32
    return %arg0, %c0_i32 : i32, i32
  }
  func.func @transform_1(%arg0: i32) -> (i32, i32) {
    %c0_i32 = arith.constant 0 : i32
    %c0_i32_0 = arith.constant 0 : i32
    %c0_i32_1 = arith.constant 0 : i32
    return %c0_i32, %c0_i32_0 : i32, i32
  }
  func.func @transform_2(%arg0: i32) -> (i32, i32) {
    %c0_i32 = arith.constant 0 : i32
    %c0_i32_0 = arith.constant 0 : i32
    return %arg0, %c0_i32 : i32, i32
  }
}

</mosaic_0001>

<llo_original>
// kernel: tpu_custom_call.1
$region0: #{tpu_custom_call.1}
  #allocation0 [shape = 'u32[]', space=smem, size = 0x4, offset = 0x4, fixed_abs, tag = 'smem constant byte address 0x4 - core index']
  #allocation1 [shape = 'u32[144,128]{1,0:T(1,128)}', space=vmem, size = 0x12000, scoped, tag = 'internal scratch']
  %s0 = inlined_call_operand.hbm [shape: f32[8,8], index: 0, kind: input, shape index: {}]
  %s1 = inlined_call_operand.hbm [shape: f32[272,128], index: 1, kind: input, shape index: {}]
  %s2 = inlined_call_operand.hbm [shape: f32[8,128], index: 2, kind: output, shape index: {}]
  %s3 = sld [smem:[#allocation0]]
  $region26: #{tpu_custom_call.1} parent=0
    _
  %s5 = ssub.s32 1, %s3
  %s6 = scalar_select 0, %s5, %s3
  $region1: #{tpu_custom_call.1} parent=0
    #allocation2 [shape = 'u8[4096]{0}', space=vmem, size = 0x1000, scoped, tag = 'input window, operand 0, single buffered']
    #allocation3 [shape = 's32[1]{0}', space=sflag, size = 0x4, scoped, tag = 'scoped memory for tpu_custom_call.1']
    #allocation4 [shape = 's32[1]{0}', space=sflag, size = 0x4, scoped, tag = 'scoped memory for tpu_custom_call.1']
    #allocation5 [shape = 'u8[139264]{0}', space=vmem, size = 0x22000, scoped, tag = 'input window, operand 1, single buffered']
    #allocation6 [shape = 's32[1]{0}', space=sflag, size = 0x4, scoped, tag = 'scoped memory for tpu_custom_call.1']
    #allocation7 [shape = 'u8[4096]{0}', space=vmem, size = 0x1000, scoped, tag = 'output window, operand 0, single buffered']
    %7 = vsyncpa [#allocation3], 0
    %8 = vsyncpa [#allocation6], 0
    %9 = vsyncpa [#allocation4], 0
    // Predicated region
    $region2: #{tpu_custom_call.1} parent=1 // pred_check
      _
    $region3: #{tpu_custom_call.1} parent=1 // pred_check_branch
      %11 = sbr.rel (0) target = $region5
    $region4: #{tpu_custom_call.1} parent=1 // pred_region
      %s13 = ssub.s32 128, 128
      %14 = vsyncadd [#allocation3], %s13
      %s16 = sshll.u32 [#allocation2], 4
      %s17 = int_to_ptr.vmem [resolvable:$true] %s16
      %19 = dma.hbm_to_vmem [thread:$0]  %s0, 128, %s17, [#allocation3]
    $region5: #{tpu_custom_call.1} parent=1 // pred_fallthru
      _
    // Predicated region
    $region6: #{tpu_custom_call.1} parent=1 // pred_check
      _
    $region7: #{tpu_custom_call.1} parent=1 // pred_check_branch
      %21 = sbr.rel (0) target = $region9
    $region8: #{tpu_custom_call.1} parent=1 // pred_region
      %s23 = ssub.s32 4352, 4352
      %24 = vsyncadd [#allocation6], %s23
      %s25 = sshll.u32 [#allocation5], 4
      %s26 = int_to_ptr.vmem [resolvable:$true] %s25
      %31 = dma.hbm_to_vmem [thread:$0]  %s1, 4352, %s26, [#allocation6], 128, 128, 8
    $region9: #{tpu_custom_call.1} parent=1 // pred_fallthru
      _
    // Predicated region
    $region10: #{tpu_custom_call.1} parent=1 // pred_check
      _
    $region11: #{tpu_custom_call.1} parent=1 // pred_check_branch
      %33 = sbr.rel (0) target = $region13
    $region12: #{tpu_custom_call.1} parent=1 // pred_region
      %34 = dma.done [#allocation3], 128
    $region13: #{tpu_custom_call.1} parent=1 // pred_fallthru
      _
    // Predicated region
    $region14: #{tpu_custom_call.1} parent=1 // pred_check
      _
    $region15: #{tpu_custom_call.1} parent=1 // pred_check_branch
      %36 = sbr.rel (0) target = $region17
    $region16: #{tpu_custom_call.1} parent=1 // pred_region
      %37 = dma.done [#allocation6], 4352
    $region17: #{tpu_custom_call.1} parent=1 // pred_fallthru
      _
    %v38 = vld [vmem:[#allocation2] sm:$0xff]
    %v39 = vld [vmem:[#allocation5] sm:$0xff]
    %v40 = vld [vmem:[#allocation5 + $0x8] sm:$0xff]
    %v41 = vld [vmem:[#allocation5 + $0x10] sm:$0xff]
    %v42 = vld [vmem:[#allocation5 + $0x18] sm:$0xff]
    %v43 = vld [vmem:[#allocation5 + $0x20] sm:$0xff]
    %v44 = vld [vmem:[#allocation5 + $0x28] sm:$0xff]
    %v45 = vld [vmem:[#allocation5 + $0x30] sm:$0xff]
    %v46 = vld [vmem:[#allocation5 + $0x38] sm:$0xff]
    %v47 = vld [vmem:[#allocation5 + $0x40] sm:$0xff]
    %v48 = vld [vmem:[#allocation5 + $0x48] sm:$0xff]
    %v49 = vld [vmem:[#allocation5 + $0x50] sm:$0xff]
    %v50 = vld [vmem:[#allocation5 + $0x58] sm:$0xff]
    %v51 = vld [vmem:[#allocation5 + $0x60] sm:$0xff]
    %v52 = vld [vmem:[#allocation5 + $0x68] sm:$0xff]
    %v53 = vld [vmem:[#allocation5 + $0x70] sm:$0xff]
    %v54 = vld [vmem:[#allocation5 + $0x78] sm:$0xff]
    %v55 = vld [vmem:[#allocation5 + $0x80] sm:$0xff]
    %v56 = vld [vmem:[#allocation5 + $0x88] sm:$0xff]
    %v57 = vld [vmem:[#allocation5 + $0x90] sm:$0xff]
    %v58 = vld [vmem:[#allocation5 + $0x98] sm:$0xff]
    %v59 = vld [vmem:[#allocation5 + $0xa0] sm:$0xff]
    %v60 = vld [vmem:[#allocation5 + $0xa8] sm:$0xff]
    %v61 = vld [vmem:[#allocation5 + $0xb0] sm:$0xff]
    %v62 = vld [vmem:[#allocation5 + $0xb8] sm:$0xff]
    %v63 = vld [vmem:[#allocation5 + $0xc0] sm:$0xff]
    %v64 = vld [vmem:[#allocation5 + $0xc8] sm:$0xff]
    %v65 = vld [vmem:[#allocation5 + $0xd0] sm:$0xff]
    %v66 = vld [vmem:[#allocation5 + $0xd8] sm:$0xff]
    %v67 = vld [vmem:[#allocation5 + $0xe0] sm:$0xff]
    %v68 = vld [vmem:[#allocation5 + $0xe8] sm:$0xff]
    %v69 = vld [vmem:[#allocation5 + $0xf0] sm:$0xff]
    %v70 = vld [vmem:[#allocation5 + $0xf8] sm:$0xff]
    %v71 = vld [vmem:[#allocation5 + $0x100] sm:$0xff]
    %v72 = vld [vmem:[#allocation5 + $0x108] sm:$0x1]
    %v73 = vld [vmem:[#allocation5 + $0x109] sm:$0x1]
    %v74 = vld [vmem:[#allocation5 + $0x10a] sm:$0x1]
    %v75 = vlaneseq
    %v76 = vshrl.u32 %v75, 7
    %v77 = vsub.s32 0, %v76
    %v78 = vrot.slane %v72, %v77
    %vm79 = vcmask 64512
    %v81 = vsel %vm79, %v38, 0
    %83 = vmatprep.subr.mxu0 0.0
    %84 = vmatpush1.msra.mxu0 0.0
    %85 = vmatprep.subr.mxu0 0.0
    %86 = vmatpush1.msra.mxu0 0.0
    %87 = vmatprep.subr.mxu0 0.0
    %88 = vmatpush1.msra.mxu0 0.0
    %89 = vmatprep.subr.mxu0 0.0
    %90 = vmatpush1.msra.mxu0 0.0
    %91 = vmatprep.subr.mxu0 0.0
    %92 = vmatpush1.msra.mxu0 0.0
    %93 = vmatprep.subr.mxu0 0.0
    %94 = vmatpush1.msra.mxu0 0.0
    %95 = vmatprep.subr.mxu0 0.0
    %96 = vmatpush1.msra.mxu0 0.0
    %97 = vmatprep.subr.mxu0 0.0
    %98 = vmatpush1.msra.mxu0 0.0
    %99 = vmatprep.subr.mxu0 0.0
    %100 = vmatpush1.msra.mxu0 0.0
    %101 = vmatprep.subr.mxu0 0.0
    %102 = vmatpush1.msra.mxu0 0.0
    %103 = vmatprep.subr.mxu0 0.0
    %104 = vmatpush1.msra.mxu0 0.0
    %105 = vmatprep.subr.mxu0 0.0
    %106 = vmatpush1.msra.mxu0 0.0
    %107 = vmatprep.subr.mxu0 0.0
    %108 = vmatpush1.msra.mxu0 0.0
    %109 = vmatprep.subr.mxu0 0.0
    %110 = vmatpush1.msra.mxu0 0.0
    %111 = vmatprep.subr.mxu0 0.0
    %112 = vmatpush1.msra.mxu0 0.0
    %113 = vmatprep.subr.mxu0 0.0
    %114 = vmatpush1.msra.mxu0 %v39
    %115 = vmatprep.subr.mxu0 0.0
    %116 = vmatpush2.msra.mxu0 0.0
    %117 = vmatprep.subr.mxu0 0.0
    %118 = vmatpush2.msra.mxu0 0.0
    %119 = vmatprep.subr.mxu0 0.0
    %120 = vmatpush2.msra.mxu0 0.0
    %121 = vmatprep.subr.mxu0 0.0
    %122 = vmatpush2.msra.mxu0 0.0
    %123 = vmatprep.subr.mxu0 0.0
    %124 = vmatpush2.msra.mxu0 0.0
    %125 = vmatprep.subr.mxu0 0.0
    %126 = vmatpush2.msra.mxu0 0.0
    %127 = vmatprep.subr.mxu0 0.0
    %128 = vmatpush2.msra.mxu0 0.0
    %129 = vmatprep.subr.mxu0 0.0
    %130 = vmatpush2.msra.mxu0 0.0
    %131 = vmatprep.subr.mxu0 0.0
    %132 = vmatpush2.msra.mxu0 0.0
    %133 = vmatprep.subr.mxu0 0.0
    %134 = vmatpush2.msra.mxu0 0.0
    %135 = vmatprep.subr.mxu0 0.0
    %136 = vmatpush2.msra.mxu0 0.0
    %137 = vmatprep.subr.mxu0 0.0
    %138 = vmatpush2.msra.mxu0 0.0
    %139 = vmatprep.subr.mxu0 0.0
    %140 = vmatpush2.msra.mxu0 0.0
    %141 = vmatprep.subr.mxu0 0.0
    %142 = vmatpush2.msra.mxu0 0.0
    %143 = vmatprep.subr.mxu0 0.0
    %144 = vmatpush2.msra.mxu0 0.0
    %145 = vmatprep.subr.mxu0 0.0
    %146 = vmatpush2.msra.mxu0 0.0
    %147 = vmatprep.mubr.f32.mxu0 0.0
    %148 = vmatmul.mubr.f32.gmra.mxu0 %v81
    %v149 = vpop.f32.mrf.mxu0
    %v150 = vadd.f32 %v78, %v149
    %v151 = vpop.f32.mrf.mxu0
    %152 = vdwg.mxu0
    %v153 = vmax.f32 %v150, 0.0
    %v154 = vlaneseq
    %v155 = vshrl.u32 %v154, 7
    %v156 = vsub.s32 0, %v155
    %v157 = vrot.slane %v73, %v156
    %158 = vmatprep.subr.mxu0 0.0
    %159 = vmatpush1.msra.mxu0 %v55
    %160 = vmatprep.subr.mxu0 0.0
    %161 = vmatpush1.msra.mxu0 %v54
    %162 = vmatprep.subr.mxu0 0.0
    %163 = vmatpush1.msra.mxu0 %v53
    %164 = vmatprep.subr.mxu0 0.0
    %165 = vmatpush1.msra.mxu0 %v52
    %166 = vmatprep.subr.mxu0 0.0
    %167 = vmatpush1.msra.mxu0 %v51
    %168 = vmatprep.subr.mxu0 0.0
    %169 = vmatpush1.msra.mxu0 %v50
    %170 = vmatprep.subr.mxu0 0.0
    %171 = vmatpush1.msra.mxu0 %v49
    %172 = vmatprep.subr.mxu0 0.0
    %173 = vmatpush1.msra.mxu0 %v48
    %174 = vmatprep.subr.mxu0 0.0
    %175 = vmatpush1.msra.mxu0 %v47
    %176 = vmatprep.subr.mxu0 0.0
    %177 = vmatpush1.msra.mxu0 %v46
    %178 = vmatprep.subr.mxu0 0.0
    %179 = vmatpush1.msra.mxu0 %v45
    %180 = vmatprep.subr.mxu0 0.0
    %181 = vmatpush1.msra.mxu0 %v44
    %182 = vmatprep.subr.mxu0 0.0
    %183 = vmatpush1.msra.mxu0 %v43
    %184 = vmatprep.subr.mxu0 0.0
    %185 = vmatpush1.msra.mxu0 %v42
    %186 = vmatprep.subr.mxu0 0.0
    %187 = vmatpush1.msra.mxu0 %v41
    %188 = vmatprep.subr.mxu0 0.0
    %189 = vmatpush1.msra.mxu0 %v40
    %190 = vmatprep.subr.mxu0 0.0
    %191 = vmatpush2.msra.mxu0 0.0
    %192 = vmatprep.subr.mxu0 0.0
    %193 = vmatpush2.msra.mxu0 0.0
    %194 = vmatprep.subr.mxu0 0.0
    %195 = vmatpush2.msra.mxu0 0.0
    %196 = vmatprep.subr.mxu0 0.0
    %197 = vmatpush2.msra.mxu0 0.0
    %198 = vmatprep.subr.mxu0 0.0
    %199 = vmatpush2.msra.mxu0 0.0
    %200 = vmatprep.subr.mxu0 0.0
    %201 = vmatpush2.msra.mxu0 0.0
    %202 = vmatprep.subr.mxu0 0.0
    %203 = vmatpush2.msra.mxu0 0.0
    %204 = vmatprep.subr.mxu0 0.0
    %205 = vmatpush2.msra.mxu0 0.0
    %206 = vmatprep.subr.mxu0 0.0
    %207 = vmatpush2.msra.mxu0 0.0
    %208 = vmatprep.subr.mxu0 0.0
    %209 = vmatpush2.msra.mxu0 0.0
    %210 = vmatprep.subr.mxu0 0.0
    %211 = vmatpush2.msra.mxu0 0.0
    %212 = vmatprep.subr.mxu0 0.0
    %213 = vmatpush2.msra.mxu0 0.0
    %214 = vmatprep.subr.mxu0 0.0
    %215 = vmatpush2.msra.mxu0 0.0
    %216 = vmatprep.subr.mxu0 0.0
    %217 = vmatpush2.msra.mxu0 0.0
    %218 = vmatprep.subr.mxu0 0.0
    %219 = vmatpush2.msra.mxu0 0.0
    %220 = vmatprep.subr.mxu0 0.0
    %221 = vmatpush2.msra.mxu0 0.0
    %222 = vmatprep.mubr.f32.mxu0 0.0
    %223 = vmatmul.mubr.f32.gmra.mxu0 %v153
    %v224 = vpop.f32.mrf.mxu0
    %v225 = vadd.f32 %v157, %v224
    %v226 = vpop.f32.mrf.mxu0
    %227 = vdwg.mxu0
    %v228 = vmax.f32 %v225, 0.0
    %v229 = vlaneseq
    %v230 = vshrl.u32 %v229, 7
    %v231 = vsub.s32 0, %v230
    %v232 = vrot.slane %v74, %v231
    %233 = vmatprep.subr.mxu0 0.0
    %234 = vmatpush1.msra.mxu0 %v71
    %235 = vmatprep.subr.mxu0 0.0
    %236 = vmatpush1.msra.mxu0 %v70
    %237 = vmatprep.subr.mxu0 0.0
    %238 = vmatpush1.msra.mxu0 %v69
    %239 = vmatprep.subr.mxu0 0.0
    %240 = vmatpush1.msra.mxu0 %v68
    %241 = vmatprep.subr.mxu0 0.0
    %242 = vmatpush1.msra.mxu0 %v67
    %243 = vmatprep.subr.mxu0 0.0
    %244 = vmatpush1.msra.mxu0 %v66
    %245 = vmatprep.subr.mxu0 0.0
    %246 = vmatpush1.msra.mxu0 %v65
    %247 = vmatprep.subr.mxu0 0.0
    %248 = vmatpush1.msra.mxu0 %v64
    %249 = vmatprep.subr.mxu0 0.0
    %250 = vmatpush1.msra.mxu0 %v63
    %251 = vmatprep.subr.mxu0 0.0
    %252 = vmatpush1.msra.mxu0 %v62
    %253 = vmatprep.subr.mxu0 0.0
    %254 = vmatpush1.msra.mxu0 %v61
    %255 = vmatprep.subr.mxu0 0.0
    %256 = vmatpush1.msra.mxu0 %v60
    %257 = vmatprep.subr.mxu0 0.0
    %258 = vmatpush1.msra.mxu0 %v59
    %259 = vmatprep.subr.mxu0 0.0
    %260 = vmatpush1.msra.mxu0 %v58
    %261 = vmatprep.subr.mxu0 0.0
    %262 = vmatpush1.msra.mxu0 %v57
    %263 = vmatprep.subr.mxu0 0.0
    %264 = vmatpush1.msra.mxu0 %v56
    %265 = vmatprep.subr.mxu0 0.0
    %266 = vmatpush2.msra.mxu0 0.0
    %267 = vmatprep.subr.mxu0 0.0
    %268 = vmatpush2.msra.mxu0 0.0
    %269 = vmatprep.subr.mxu0 0.0
    %270 = vmatpush2.msra.mxu0 0.0
    %271 = vmatprep.subr.mxu0 0.0
    %272 = vmatpush2.msra.mxu0 0.0
    %273 = vmatprep.subr.mxu0 0.0
    %274 = vmatpush2.msra.mxu0 0.0
    %275 = vmatprep.subr.mxu0 0.0
    %276 = vmatpush2.msra.mxu0 0.0
    %277 = vmatprep.subr.mxu0 0.0
    %278 = vmatpush2.msra.mxu0 0.0
    %279 = vmatprep.subr.mxu0 0.0
    %280 = vmatpush2.msra.mxu0 0.0
    %281 = vmatprep.subr.mxu0 0.0
    %282 = vmatpush2.msra.mxu0 0.0
    %283 = vmatprep.subr.mxu0 0.0
    %284 = vmatpush2.msra.mxu0 0.0
    %285 = vmatprep.subr.mxu0 0.0
    %286 = vmatpush2.msra.mxu0 0.0
    %287 = vmatprep.subr.mxu0 0.0
    %288 = vmatpush2.msra.mxu0 0.0
    %289 = vmatprep.subr.mxu0 0.0
    %290 = vmatpush2.msra.mxu0 0.0
    %291 = vmatprep.subr.mxu0 0.0
    %292 = vmatpush2.msra.mxu0 0.0
    %293 = vmatprep.subr.mxu0 0.0
    %294 = vmatpush2.msra.mxu0 0.0
    %295 = vmatprep.subr.mxu0 0.0
    %296 = vmatpush2.msra.mxu0 0.0
    %297 = vmatprep.mubr.f32.mxu0 0.0
    %298 = vmatmul.mubr.f32.gmra.mxu0 %v228
    %v299 = vpop.f32.mrf.mxu0
    %v300 = vadd.f32 %v232, %v299
    %v301 = vpop.f32.mrf.mxu0
    %302 = vdwg.mxu0
    %v303 = vmax.f32 %v300, 0.0
    %v304 = vand.u32 2147483647, %v300
    %v305 = vsub.f32 0.0, %v304
    %v306 = vmul.f32 %v305, 1.442695
    %v307 = vpow.pop %v306
    %v308 = vadd.f32 %v307, 1.0
    %v309 = vlog2.pop %v308
    %v310 = vmul.f32 %v309, 0.6931472
    %v311 = vmul.f32 -0.5, %v307
    %v312 = vadd.f32 %v311, 1.0
    %v313 = vmul.f32 %v312, %v307
    %v314 = vand.u32 2147483647, %v307
    %vm315 = vcmp.lt.f32.partialorder %v314, 0.0004427343
    %v316 = vsel %vm315, %v313, %v310
    %v317 = vadd.f32 %v303, %v316
    %v318 = vlaneseq
    %v319 = vand.u32 %v318, 127
    %vm320 = vcmp.ge.s32.totalorder %v319, 2
    %vm321 = vcmp.lt.s32.totalorder %v319, 4
    %vm322 = vmand %vm320, %vm321
    %v323 = vsel %vm322, %v317, %v300
    %324 = vst [vmem:[#allocation7] sm:$0xff] %v323
    // Predicated region
    $region18: #{tpu_custom_call.1} parent=1 // pred_check
      _
    $region19: #{tpu_custom_call.1} parent=1 // pred_check_branch
      %326 = sbr.rel (0) target = $region21
    $region20: #{tpu_custom_call.1} parent=1 // pred_region
      %s328 = ssub.s32 128, 128
      %329 = vsyncadd [#allocation4], %s328
      %s331 = sshll.u32 [#allocation7], 4
      %s332 = int_to_ptr.vmem [resolvable:$true] %s331
      %334 = dma.vmem_to_hbm [thread:$0]  %s332, 128, %s2, [#allocation4]
    $region21: #{tpu_custom_call.1} parent=1 // pred_fallthru
      _
    // Predicated region
    $region22: #{tpu_custom_call.1} parent=1 // pred_check
      _
    $region23: #{tpu_custom_call.1} parent=1 // pred_check_branch
      %336 = sbr.rel (0) target = $region25
    $region24: #{tpu_custom_call.1} parent=1 // pred_region
      %337 = dma.done [#allocation4], 128
    $region25: #{tpu_custom_call.1} parent=1 // pred_fallthru
      _
    %338 = vsyncpa [#allocation3], 1
    %339 = vsyncpa [#allocation6], 1
    %340 = vsyncpa [#allocation4], 1

</llo_original>
